<compile_context>
chip_gen: v7x
topology: tpu7x:2x2x1
jax: 0.10.0
libtpu: 0.0.40
codegen_flags: <defaults>
</compile_context>

<pallas_src>
import functools

import jax
import jax.numpy as jnp
from jax.experimental import pallas as pl
from jax.experimental.pallas import tpu as pltpu

LANE = 128


def _round_up(x: int, m: int) -> int:
    return ((x + m - 1) // m) * m


def mlpsgc_kernel(x_ref, w_ref, b_ref, scale_ref, offset_ref, o_ref, *, inv_dout):
    # dropout (p=0.0) -> identity; Linear -> ReLU.  Single MXU push, f32 accumulation.
    h = jnp.dot(x_ref[...], w_ref[...], preferred_element_type=jnp.float32) + b_ref[...]
    h = jnp.maximum(h, 0.0)                                   # act='relu'

    # norm_feat: per-node feature norm (unbiased=False), one-pass mean/var.
    # Padded feature columns of h are exactly zero, so lane-wide sums equal sums over
    # the true DOUT columns; divide by the true DOUT, not the padded width.
    mean = jnp.sum(h, axis=1, keepdims=True) * inv_dout        # (tile_n, 1)
    ex2 = jnp.sum(h * h, axis=1, keepdims=True) * inv_dout     # (tile_n, 1)
    var = ex2 - mean * mean + 1e-9
    g = scale_ref[...] * jax.lax.rsqrt(var)                    # (1,Dp) x (tile_n,1) outer broadcast
    o_ref[...] = (h - mean) * g + offset_ref[...]


def mlpsgc_forward(inputs, w, b, scale, offset, *, tile_n=512):
    """Mirrors MLPSGC.forward(inputs) -> (feat_out, None, None, None)."""
    assert isinstance(inputs, (list, tuple)) and len(inputs) == 4
    feat_in = inputs[0]
    n, din = feat_in.shape
    dout = w.shape[1]

    # ---- lane-dense feature dim: zero-pad DOUT up to a multiple of 128 ------------
    dpad = _round_up(dout, LANE)
    pf = dpad - dout
    w_p = jnp.pad(w, ((0, 0), (0, pf)))
    b_p = jnp.pad(jnp.reshape(b, (1, dout)), ((0, 0), (0, pf)))
    scale_p = jnp.pad(jnp.reshape(scale, (1, dout)), ((0, 0), (0, pf)))
    offset_p = jnp.pad(jnp.reshape(offset, (1, dout)), ((0, 0), (0, pf)))

    # ---- row-tiled grid; pad rows to a multiple of the tile ----------------------
    tile_n = min(tile_n, _round_up(n, 8))
    n_pad = _round_up(n, tile_n)
    x_p = jnp.pad(feat_in, ((0, n_pad - n), (0, 0))) if n_pad != n else feat_in

    kernel = functools.partial(mlpsgc_kernel, inv_dout=1.0 / dout)
    out = pl.pallas_call(
        kernel,
        out_shape=jax.ShapeDtypeStruct((n_pad, dpad), jnp.float32),
        grid_spec=pltpu.PrefetchScalarGridSpec(
            num_scalar_prefetch=0,
            grid=(n_pad // tile_n,),
            in_specs=[
                pl.BlockSpec((tile_n, din), lambda i: (i, 0)),   # X: streamed per row tile
                pl.BlockSpec((din, dpad), lambda i: (0, 0)),     # W: DMA'd once, resident
                pl.BlockSpec((1, dpad), lambda i: (0, 0)),       # bias: resident
                pl.BlockSpec((1, dpad), lambda i: (0, 0)),       # scale: resident
                pl.BlockSpec((1, dpad), lambda i: (0, 0)),       # offset: resident
            ],
            out_specs=pl.BlockSpec((tile_n, dpad), lambda i: (i, 0)),
        ),
        compiler_params=pltpu.CompilerParams(
            dimension_semantics=("parallel",),   # shard row tiles across v7x's 2 TCs
        ),
    )(x_p, w_p, b_p, scale_p, offset_p)

    feat_out = out[:n, :dout]
    return feat_out, None, None, None


def mlpsgc_ref(feat_in, w, b, scale, offset):
    h = jnp.maximum(feat_in @ w + b, 0.0)
    mean = h.mean(axis=1, keepdims=True)
    var = ((h - mean) ** 2).mean(axis=1, keepdims=True) + 1e-9
    return (h - mean) * scale * jax.lax.rsqrt(var) + offset


if __name__ == "__main__":
    N, DIN, DOUT = 64, 32, 32
    key = jax.random.PRNGKey(0)
    k_x, k_w, k_b = jax.random.split(key, 3)

    # node features (the other 3 entries of MLPSGC's `inputs` tuple are unused)
    feat_in = jax.random.normal(k_x, (N, DIN), dtype=jnp.float32)

    # nn.Linear init: U(-1/sqrt(fan_in), +1/sqrt(fan_in))
    k1 = 1.0 / (DIN ** 0.5)
    w = jax.random.uniform(k_w, (DIN, DOUT), minval=-k1, maxval=k1, dtype=jnp.float32)
    b = jax.random.uniform(k_b, (1, DOUT), minval=-k1, maxval=k1, dtype=jnp.float32)
    scale = jnp.ones((1, DOUT), dtype=jnp.float32)    # self.scale
    offset = jnp.zeros((1, DOUT), dtype=jnp.float32)  # self.offset

    inputs = (feat_in, None, None, None)
    out, _, _, _ = mlpsgc_forward(inputs, w, b, scale, offset)
    out = jax.block_until_ready(out)

    ref = mlpsgc_ref(feat_in, w, b, scale, offset)
    assert out.shape == (N, DOUT)
    assert jnp.allclose(out, ref, atol=1e-5, rtol=1e-5), "mismatch vs reference"
    print("KERNEL_OK")
</pallas_src>

<mosaic_0001>
module attributes {stable_mosaic.version = 11 : i64} {
  func.func @mlpsgc_kernel(%arg0: i32, %arg1: memref<64x32xf32, #tpu.memory_space<vmem>>, %arg2: memref<32x128xf32, #tpu.memory_space<vmem>>, %arg3: memref<1x128xf32, #tpu.memory_space<vmem>>, %arg4: memref<1x128xf32, #tpu.memory_space<vmem>>, %arg5: memref<1x128xf32, #tpu.memory_space<vmem>>, %arg6: memref<64x128xf32, #tpu.memory_space<vmem>>) attributes {dimension_semantics = [#tpu.dimension_semantics<parallel>], iteration_bounds = array<i64: 1>, scalar_prefetch = 0 : i64, scratch_operands = 0 : i64, tpu.core_type = #tpu.core_type<tc>, window_params = [{transform_indices = @transform_0, window_bounds = array<i64: 64, 32>}, {pipeline_mode = #tpu.pipeline_mode<synchronous>, transform_indices = @transform_1, window_bounds = array<i64: 32, 128>}, {pipeline_mode = #tpu.pipeline_mode<synchronous>, transform_indices = @transform_2, window_bounds = array<i64: 1, 128>}, {pipeline_mode = #tpu.pipeline_mode<synchronous>, transform_indices = @transform_3, window_bounds = array<i64: 1, 128>}, {pipeline_mode = #tpu.pipeline_mode<synchronous>, transform_indices = @transform_4, window_bounds = array<i64: 1, 128>}, {transform_indices = @transform_5, window_bounds = array<i64: 64, 128>}]} {
    %c0 = arith.constant 0 : index
    %c0_0 = arith.constant 0 : index
    %0 = vector.load %arg1[%c0, %c0_0] : memref<64x32xf32, #tpu.memory_space<vmem>>, vector<64x32xf32>
    %c0_1 = arith.constant 0 : index
    %c0_2 = arith.constant 0 : index
    %1 = vector.load %arg2[%c0_1, %c0_2] : memref<32x128xf32, #tpu.memory_space<vmem>>, vector<32x128xf32>
    %cst = arith.constant dense<0.000000e+00> : vector<64x128xf32>
    %2 = tpu.matmul %0, %1, %cst {dimension_numbers = #tpu.dot_dimension_numbers<[1], [0], [0], [1], [0, 0, 1, 1], [], []>} : vector<64x32xf32>, vector<32x128xf32>, vector<64x128xf32> -> vector<64x128xf32>
    %c0_3 = arith.constant 0 : index
    %c0_4 = arith.constant 0 : index
    %3 = vector.load %arg3[%c0_3, %c0_4] : memref<1x128xf32, #tpu.memory_space<vmem>>, vector<1x128xf32>
    %4 = vector.broadcast %3 : vector<1x128xf32> to vector<64x128xf32>
    %5 = arith.addf %2, %4 : vector<64x128xf32>
    %cst_5 = arith.constant 0.000000e+00 : f32
    %6 = vector.broadcast %cst_5 : f32 to vector<64x128xf32>
    %7 = arith.maximumf %5, %6 : vector<64x128xf32>
    %cst_6 = arith.constant dense<0.000000e+00> : vector<64xf32>
    %8 = vector.multi_reduction <add>, %7, %cst_6 [1] : vector<64x128xf32> to vector<64xf32>
    %9 = vector.shape_cast %8 : vector<64xf32> to vector<64x1xf32>
    %cst_7 = arith.constant 3.125000e-02 : f32
    %10 = vector.broadcast %cst_7 : f32 to vector<64x1xf32>
    %11 = arith.mulf %9, %10 : vector<64x1xf32>
    %12 = arith.mulf %7, %7 : vector<64x128xf32>
    %cst_8 = arith.constant dense<0.000000e+00> : vector<64xf32>
    %13 = vector.multi_reduction <add>, %12, %cst_8 [1] : vector<64x128xf32> to vector<64xf32>
    %14 = vector.shape_cast %13 : vector<64xf32> to vector<64x1xf32>
    %cst_9 = arith.constant 3.125000e-02 : f32
    %15 = vector.broadcast %cst_9 : f32 to vector<64x1xf32>
    %16 = arith.mulf %14, %15 : vector<64x1xf32>
    %17 = arith.mulf %11, %11 : vector<64x1xf32>
    %18 = arith.subf %16, %17 : vector<64x1xf32>
    %cst_10 = arith.constant 9.99999971E-10 : f32
    %19 = vector.broadcast %cst_10 : f32 to vector<64x1xf32>
    %20 = arith.addf %18, %19 : vector<64x1xf32>
    %c0_11 = arith.constant 0 : index
    %c0_12 = arith.constant 0 : index
    %21 = vector.load %arg4[%c0_11, %c0_12] : memref<1x128xf32, #tpu.memory_space<vmem>>, vector<1x128xf32>
    %22 = math.rsqrt %20 : vector<64x1xf32>
    %23 = vector.broadcast %21 : vector<1x128xf32> to vector<64x128xf32>
    %24 = vector.broadcast %22 : vector<64x1xf32> to vector<64x128xf32>
    %25 = arith.mulf %23, %24 : vector<64x128xf32>
    %26 = vector.broadcast %11 : vector<64x1xf32> to vector<64x128xf32>
    %27 = arith.subf %7, %26 : vector<64x128xf32>
    %28 = arith.mulf %27, %25 : vector<64x128xf32>
    %c0_13 = arith.constant 0 : index
    %c0_14 = arith.constant 0 : index
    %29 = vector.load %arg5[%c0_13, %c0_14] : memref<1x128xf32, #tpu.memory_space<vmem>>, vector<1x128xf32>
    %30 = vector.broadcast %29 : vector<1x128xf32> to vector<64x128xf32>
    %31 = arith.addf %28, %30 : vector<64x128xf32>
    %c0_15 = arith.constant 0 : index
    %c0_16 = arith.constant 0 : index
    %32 = vector.load %arg6[%c0_15, %c0_16] : memref<64x128xf32, #tpu.memory_space<vmem>>, vector<64x128xf32>
    tpu.vector_store %arg6[%c0_15, %c0_16], %31 {strides = array<i32>} : memref<64x128xf32, #tpu.memory_space<vmem>>, vector<64x128xf32>,
    return
  }
  func.func @transform_0(%arg0: i32) -> (i32, i32) {
    %c0_i32 = arith.constant 0 : i32
    %c0_i32_0 = arith.constant 0 : i32
    return %arg0, %c0_i32 : i32, i32
  }
  func.func @transform_1(%arg0: i32) -> (i32, i32) {
    %c0_i32 = arith.constant 0 : i32
    %c0_i32_0 = arith.constant 0 : i32
    %c0_i32_1 = arith.constant 0 : i32
    return %c0_i32, %c0_i32_0 : i32, i32
  }
  func.func @transform_2(%arg0: i32) -> (i32, i32) {
    %c0_i32 = arith.constant 0 : i32
    %c0_i32_0 = arith.constant 0 : i32
    %c0_i32_1 = arith.constant 0 : i32
    return %c0_i32, %c0_i32_0 : i32, i32
  }
  func.func @transform_3(%arg0: i32) -> (i32, i32) {
    %c0_i32 = arith.constant 0 : i32
    %c0_i32_0 = arith.constant 0 : i32
    %c0_i32_1 = arith.constant 0 : i32
    return %c0_i32, %c0_i32_0 : i32, i32
  }
  func.func @transform_4(%arg0: i32) -> (i32, i32) {
    %c0_i32 = arith.constant 0 : i32
    %c0_i32_0 = arith.constant 0 : i32
    %c0_i32_1 = arith.constant 0 : i32
    return %c0_i32, %c0_i32_0 : i32, i32
  }
  func.func @transform_5(%arg0: i32) -> (i32, i32) {
    %c0_i32 = arith.constant 0 : i32
    %c0_i32_0 = arith.constant 0 : i32
    return %arg0, %c0_i32 : i32, i32
  }
}

</mosaic_0001>

<llo_original>
// kernel: tpu_custom_call.1
$region0: #{tpu_custom_call.1}
  #allocation0 [shape = 'u32[]', space=smem, size = 0x4, offset = 0x4, fixed_abs, tag = 'smem constant byte address 0x4 - core index']
  #allocation1 [shape = 'u32[144,128]{1,0:T(1,128)}', space=vmem, size = 0x12000, scoped, tag = 'internal scratch']
  %s0 = inlined_call_operand.vmem [shape: f32[64,32], index: 0, kind: input, shape index: {}]
  %s1 = inlined_call_operand.vmem [shape: f32[32,128], index: 1, kind: input, shape index: {}]
  %s2 = inlined_call_operand.vmem [shape: f32[1,128], index: 2, kind: input, shape index: {}]
  %s3 = inlined_call_operand.vmem [shape: f32[1,128], index: 3, kind: input, shape index: {}]
  %s4 = inlined_call_operand.vmem [shape: f32[1,128], index: 4, kind: input, shape index: {}]
  %s5 = inlined_call_operand.hbm [shape: f32[64,128], index: 5, kind: output, shape index: {}]
  %s6 = sld [smem:[#allocation0]]
  $region30: #{tpu_custom_call.1} parent=0
    _
  %s8 = ssub.s32 1, %s6
  %s9 = scalar_select 0, %s8, %s6
  $region1: #{tpu_custom_call.1} parent=0
    #allocation2 [shape = 'u8[32768]{0}', space=vmem, size = 0x8000, scoped, tag = 'output window, operand 0, single buffered']
    #allocation3 [shape = 's32[1]{0}', space=sflag, size = 0x4, scoped, tag = 'scoped memory for tpu_custom_call.1']
    %10 = vsyncpa [#allocation3], 0
    // Predicated region
    $region2: #{tpu_custom_call.1} parent=1 // pred_check
      _
    $region3: #{tpu_custom_call.1} parent=1 // pred_check_branch
      %12 = sbr.rel (0) target = $region5
    $region4: #{tpu_custom_call.1} parent=1 // pred_region
      _
    $region5: #{tpu_custom_call.1} parent=1 // pred_fallthru
      _
    // Predicated region
    $region6: #{tpu_custom_call.1} parent=1 // pred_check
      _
    $region7: #{tpu_custom_call.1} parent=1 // pred_check_branch
      %14 = sbr.rel (0) target = $region9
    $region8: #{tpu_custom_call.1} parent=1 // pred_region
      _
    $region9: #{tpu_custom_call.1} parent=1 // pred_fallthru
      _
    // Predicated region
    $region10: #{tpu_custom_call.1} parent=1 // pred_check
      _
    $region11: #{tpu_custom_call.1} parent=1 // pred_check_branch
      %16 = sbr.rel (0) target = $region13
    $region12: #{tpu_custom_call.1} parent=1 // pred_region
      _
    $region13: #{tpu_custom_call.1} parent=1 // pred_fallthru
      _
    // Predicated region
    $region14: #{tpu_custom_call.1} parent=1 // pred_check
      _
    $region15: #{tpu_custom_call.1} parent=1 // pred_check_branch
      %18 = sbr.rel (0) target = $region17
    $region16: #{tpu_custom_call.1} parent=1 // pred_region
      _
    $region17: #{tpu_custom_call.1} parent=1 // pred_fallthru
      _
    // Predicated region
    $region18: #{tpu_custom_call.1} parent=1 // pred_check
      _
    $region19: #{tpu_custom_call.1} parent=1 // pred_check_branch
      %20 = sbr.rel (0) target = $region21
    $region20: #{tpu_custom_call.1} parent=1 // pred_region
      _
    $region21: #{tpu_custom_call.1} parent=1 // pred_fallthru
      _
    %v21 = vld [vmem:[%s0] sm:$0xff]
    %v22 = vld [vmem:[%s0 + $0x8] sm:$0xff]
    %v23 = vld [vmem:[%s0 + $0x10] sm:$0xff]
    %v24 = vld [vmem:[%s0 + $0x18] sm:$0xff]
    %v25 = vld [vmem:[%s0 + $0x20] sm:$0xff]
    %v26 = vld [vmem:[%s0 + $0x28] sm:$0xff]
    %v27 = vld [vmem:[%s0 + $0x30] sm:$0xff]
    %v28 = vld [vmem:[%s0 + $0x38] sm:$0xff]
    %v29 = vld [vmem:[%s1] sm:$0xff]
    %v30 = vld [vmem:[%s1 + $0x8] sm:$0xff]
    %v31 = vld [vmem:[%s1 + $0x10] sm:$0xff]
    %v32 = vld [vmem:[%s1 + $0x18] sm:$0xff]
    %v33 = vld [vmem:[%s2] sm:$0x1]
    %v35 = vlaneseq
    %v36 = vshrl.u32 %v35, 7
    %v37 = vsub.s32 0, %v36
    %v38 = vrot.slane %v33, %v37
    %vm40 = vcmask 261120
    %v42 = vsel %vm40, %v21, 0
    %v45 = vsel %vm40, %v22, 0
    %v48 = vsel %vm40, %v23, 0
    %v51 = vsel %vm40, %v24, 0
    %v54 = vsel %vm40, %v25, 0
    %v57 = vsel %vm40, %v26, 0
    %v60 = vsel %vm40, %v27, 0
    %v63 = vsel %vm40, %v28, 0
    %65 = vmatprep.subr.mxu0 0.0
    %66 = vmatpush1.msra.mxu0 %v29
    %67 = vmatprep.subr.mxu0 0.0
    %68 = vmatpush1.msra.mxu0 %v30
    %69 = vmatprep.subr.mxu0 0.0
    %70 = vmatpush1.msra.mxu0 %v31
    %71 = vmatprep.subr.mxu0 0.0
    %72 = vmatpush1.msra.mxu0 %v32
    %73 = vmatprep.subr.mxu0 0.0
    %74 = vmatpush1.msra.mxu0 0.0
    %75 = vmatprep.subr.mxu0 0.0
    %76 = vmatpush1.msra.mxu0 0.0
    %77 = vmatprep.subr.mxu0 0.0
    %78 = vmatpush1.msra.mxu0 0.0
    %79 = vmatprep.subr.mxu0 0.0
    %80 = vmatpush1.msra.mxu0 0.0
    %81 = vmatprep.subr.mxu0 0.0
    %82 = vmatpush1.msra.mxu0 0.0
    %83 = vmatprep.subr.mxu0 0.0
    %84 = vmatpush1.msra.mxu0 0.0
    %85 = vmatprep.subr.mxu0 0.0
    %86 = vmatpush1.msra.mxu0 0.0
    %87 = vmatprep.subr.mxu0 0.0
    %88 = vmatpush1.msra.mxu0 0.0
    %89 = vmatprep.subr.mxu0 0.0
    %90 = vmatpush1.msra.mxu0 0.0
    %91 = vmatprep.subr.mxu0 0.0
    %92 = vmatpush1.msra.mxu0 0.0
    %93 = vmatprep.subr.mxu0 0.0
    %94 = vmatpush1.msra.mxu0 0.0
    %95 = vmatprep.subr.mxu0 0.0
    %96 = vmatpush1.msra.mxu0 0.0
    %97 = vmatprep.subr.mxu0 0.0
    %98 = vmatpush1.msra.mxu0 0.0
    %99 = vmatprep.subr.mxu0 0.0
    %100 = vmatpush1.msra.mxu0 0.0
    %101 = vmatprep.subr.mxu0 0.0
    %102 = vmatpush1.msra.mxu0 0.0
    %103 = vmatprep.subr.mxu0 0.0
    %104 = vmatpush1.msra.mxu0 0.0
    %105 = vmatprep.subr.mxu0 0.0
    %106 = vmatpush1.msra.mxu0 0.0
    %107 = vmatprep.subr.mxu0 0.0
    %108 = vmatpush1.msra.mxu0 0.0
    %109 = vmatprep.subr.mxu0 0.0
    %110 = vmatpush1.msra.mxu0 0.0
    %111 = vmatprep.subr.mxu0 0.0
    %112 = vmatpush1.msra.mxu0 0.0
    %113 = vmatprep.subr.mxu0 0.0
    %114 = vmatpush1.msra.mxu0 0.0
    %115 = vmatprep.subr.mxu0 0.0
    %116 = vmatpush1.msra.mxu0 0.0
    %117 = vmatprep.subr.mxu0 0.0
    %118 = vmatpush1.msra.mxu0 0.0
    %119 = vmatprep.subr.mxu0 0.0
    %120 = vmatpush1.msra.mxu0 0.0
    %121 = vmatprep.subr.mxu0 0.0
    %122 = vmatpush1.msra.mxu0 0.0
    %123 = vmatprep.subr.mxu0 0.0
    %124 = vmatpush1.msra.mxu0 0.0
    %125 = vmatprep.subr.mxu0 0.0
    %126 = vmatpush1.msra.mxu0 0.0
    %127 = vmatprep.subr.mxu0 0.0
    %128 = vmatpush1.msra.mxu0 0.0
    %129 = vmatprep.mubr.f32.mxu0 0.0
    %130 = vmatmul.mubr.f32.gmra.mrb[0].mxu0 %v42
    %v131 = vpop.f32.mrb[0].mxu0
    %v132 = vadd.f32 %v38, %v131
    %v133 = vpop.f32.mrb[0].mxu0
    %134 = vmatprep.mubr.f32.mxu0 0.0
    %135 = vmatmul.mubr.f32.gmra.mrb[0].mxu0 %v45
    %v136 = vpop.f32.mrb[0].mxu0
    %v137 = vadd.f32 %v38, %v136
    %v138 = vpop.f32.mrb[0].mxu0
    %139 = vmatprep.mubr.f32.mxu0 0.0
    %140 = vmatmul.mubr.f32.gmra.mrb[0].mxu0 %v48
    %v141 = vpop.f32.mrb[0].mxu0
    %v142 = vadd.f32 %v38, %v141
    %v143 = vpop.f32.mrb[0].mxu0
    %144 = vmatprep.mubr.f32.mxu0 0.0
    %145 = vmatmul.mubr.f32.gmra.mrb[0].mxu0 %v51
    %v146 = vpop.f32.mrb[0].mxu0
    %v147 = vadd.f32 %v38, %v146
    %v148 = vpop.f32.mrb[0].mxu0
    %149 = vmatprep.mubr.f32.mxu0 0.0
    %150 = vmatmul.mubr.f32.gmra.mrb[0].mxu0 %v54
    %v151 = vpop.f32.mrb[0].mxu0
    %v152 = vadd.f32 %v38, %v151
    %v153 = vpop.f32.mrb[0].mxu0
    %154 = vmatprep.mubr.f32.mxu0 0.0
    %155 = vmatmul.mubr.f32.gmra.mrb[0].mxu0 %v57
    %v156 = vpop.f32.mrb[0].mxu0
    %v157 = vadd.f32 %v38, %v156
    %v158 = vpop.f32.mrb[0].mxu0
    %159 = vmatprep.mubr.f32.mxu0 0.0
    %160 = vmatmul.mubr.f32.gmra.mrb[0].mxu0 %v60
    %v161 = vpop.f32.mrb[0].mxu0
    %v162 = vadd.f32 %v38, %v161
    %v163 = vpop.f32.mrb[0].mxu0
    %164 = vmatprep.mubr.f32.mxu0 0.0
    %165 = vmatmul.mubr.f32.gmra.mrb[0].mxu0 %v63
    %v166 = vpop.f32.mrb[0].mxu0
    %v167 = vadd.f32 %v38, %v166
    %v168 = vpop.f32.mrb[0].mxu0
    %169 = vdwg.mxu0
    %v170 = vmax.f32 %v132, 0.0
    %v171 = vmax.f32 %v137, 0.0
    %v172 = vmax.f32 %v142, 0.0
    %v173 = vmax.f32 %v147, 0.0
    %v174 = vmax.f32 %v152, 0.0
    %v175 = vmax.f32 %v157, 0.0
    %v176 = vmax.f32 %v162, 0.0
    %v177 = vmax.f32 %v167, 0.0
    %178 = vadd.xlane.f32.xlu0 %v170
    %v179 = vpop.xlane.xlu0 %178
    %180 = vadd.xlane.f32.xlu0 %v171
    %v181 = vpop.xlane.xlu0 %180
    %182 = vadd.xlane.f32.xlu0 %v172
    %v183 = vpop.xlane.xlu0 %182
    %184 = vadd.xlane.f32.xlu0 %v173
    %v185 = vpop.xlane.xlu0 %184
    %186 = vadd.xlane.f32.xlu0 %v174
    %v187 = vpop.xlane.xlu0 %186
    %188 = vadd.xlane.f32.xlu0 %v175
    %v189 = vpop.xlane.xlu0 %188
    %190 = vadd.xlane.f32.xlu0 %v176
    %v191 = vpop.xlane.xlu0 %190
    %192 = vadd.xlane.f32.xlu0 %v177
    %v193 = vpop.xlane.xlu0 %192
    %v194 = vmul.f32 %v179, 0.03125
    %v195 = vmul.f32 %v181, 0.03125
    %v196 = vmul.f32 %v183, 0.03125
    %v197 = vmul.f32 %v185, 0.03125
    %v198 = vmul.f32 %v187, 0.03125
    %v199 = vmul.f32 %v189, 0.03125
    %v200 = vmul.f32 %v191, 0.03125
    %v201 = vmul.f32 %v193, 0.03125
    %v202 = vmul.f32 %v170, %v170
    %v203 = vmul.f32 %v171, %v171
    %v204 = vmul.f32 %v172, %v172
    %v205 = vmul.f32 %v173, %v173
    %v206 = vmul.f32 %v174, %v174
    %v207 = vmul.f32 %v175, %v175
    %v208 = vmul.f32 %v176, %v176
    %v209 = vmul.f32 %v177, %v177
    %210 = vadd.xlane.f32.xlu0 %v202
    %v211 = vpop.xlane.xlu0 %210
    %212 = vadd.xlane.f32.xlu0 %v203
    %v213 = vpop.xlane.xlu0 %212
    %214 = vadd.xlane.f32.xlu0 %v204
    %v215 = vpop.xlane.xlu0 %214
    %216 = vadd.xlane.f32.xlu0 %v205
    %v217 = vpop.xlane.xlu0 %216
    %218 = vadd.xlane.f32.xlu0 %v206
    %v219 = vpop.xlane.xlu0 %218
    %220 = vadd.xlane.f32.xlu0 %v207
    %v221 = vpop.xlane.xlu0 %220
    %222 = vadd.xlane.f32.xlu0 %v208
    %v223 = vpop.xlane.xlu0 %222
    %224 = vadd.xlane.f32.xlu0 %v209
    %v225 = vpop.xlane.xlu0 %224
    %v226 = vmul.f32 %v211, 0.03125
    %v227 = vmul.f32 %v213, 0.03125
    %v228 = vmul.f32 %v215, 0.03125
    %v229 = vmul.f32 %v217, 0.03125
    %v230 = vmul.f32 %v219, 0.03125
    %v231 = vmul.f32 %v221, 0.03125
    %v232 = vmul.f32 %v223, 0.03125
    %v233 = vmul.f32 %v225, 0.03125
    %v234 = vmul.f32 %v194, %v194
    %v235 = vmul.f32 %v195, %v195
    %v236 = vmul.f32 %v196, %v196
    %v237 = vmul.f32 %v197, %v197
    %v238 = vmul.f32 %v198, %v198
    %v239 = vmul.f32 %v199, %v199
    %v240 = vmul.f32 %v200, %v200
    %v241 = vmul.f32 %v201, %v201
    %v242 = vsub.f32 %v226, %v234
    %v243 = vsub.f32 %v227, %v235
    %v244 = vsub.f32 %v228, %v236
    %v245 = vsub.f32 %v229, %v237
    %v246 = vsub.f32 %v230, %v238
    %v247 = vsub.f32 %v231, %v239
    %v248 = vsub.f32 %v232, %v240
    %v249 = vsub.f32 %v233, %v241
    %v250 = vadd.f32 %v242, 1e-09
    %v251 = vadd.f32 %v243, 1e-09
    %v252 = vadd.f32 %v244, 1e-09
    %v253 = vadd.f32 %v245, 1e-09
    %v254 = vadd.f32 %v246, 1e-09
    %v255 = vadd.f32 %v247, 1e-09
    %v256 = vadd.f32 %v248, 1e-09
    %v257 = vadd.f32 %v249, 1e-09
    %v258 = vld [vmem:[%s3] sm:$0x1]
    %v259 = vrsqrt.pop %v250
    %v260 = vrsqrt.pop %v251
    %v261 = vrsqrt.pop %v252
    %v262 = vrsqrt.pop %v253
    %v263 = vrsqrt.pop %v254
    %v264 = vrsqrt.pop %v255
    %v265 = vrsqrt.pop %v256
    %v266 = vrsqrt.pop %v257
    %v268 = vlaneseq
    %v269 = vshrl.u32 %v268, 7
    %v270 = vsub.s32 0, %v269
    %v271 = vrot.slane %v258, %v270
    %v273 = vmul.f32 %v271, %v259
    %v274 = vmul.f32 %v271, %v260
    %v275 = vmul.f32 %v271, %v261
    %v276 = vmul.f32 %v271, %v262
    %v277 = vmul.f32 %v271, %v263
    %v278 = vmul.f32 %v271, %v264
    %v279 = vmul.f32 %v271, %v265
    %v280 = vmul.f32 %v271, %v266
    %v281 = vsub.f32 %v170, %v194
    %v282 = vsub.f32 %v171, %v195
    %v283 = vsub.f32 %v172, %v196
    %v284 = vsub.f32 %v173, %v197
    %v285 = vsub.f32 %v174, %v198
    %v286 = vsub.f32 %v175, %v199
    %v287 = vsub.f32 %v176, %v200
    %v288 = vsub.f32 %v177, %v201
    %v289 = vmul.f32 %v281, %v273
    %v290 = vmul.f32 %v282, %v274
    %v291 = vmul.f32 %v283, %v275
    %v292 = vmul.f32 %v284, %v276
    %v293 = vmul.f32 %v285, %v277
    %v294 = vmul.f32 %v286, %v278
    %v295 = vmul.f32 %v287, %v279
    %v296 = vmul.f32 %v288, %v280
    %v297 = vld [vmem:[%s4] sm:$0x1]
    %v299 = vlaneseq
    %v300 = vshrl.u32 %v299, 7
    %v301 = vsub.s32 0, %v300
    %v302 = vrot.slane %v297, %v301
    %v304 = vadd.f32 %v289, %v302
    %v305 = vadd.f32 %v290, %v302
    %v306 = vadd.f32 %v291, %v302
    %v307 = vadd.f32 %v292, %v302
    %v308 = vadd.f32 %v293, %v302
    %v309 = vadd.f32 %v294, %v302
    %v310 = vadd.f32 %v295, %v302
    %v311 = vadd.f32 %v296, %v302
    %312 = vst [vmem:[#allocation2] sm:$0xff] %v304
    %313 = vst [vmem:[#allocation2 + $0x8] sm:$0xff] %v305
    %314 = vst [vmem:[#allocation2 + $0x10] sm:$0xff] %v306
    %315 = vst [vmem:[#allocation2 + $0x18] sm:$0xff] %v307
    %316 = vst [vmem:[#allocation2 + $0x20] sm:$0xff] %v308
    %317 = vst [vmem:[#allocation2 + $0x28] sm:$0xff] %v309
    %318 = vst [vmem:[#allocation2 + $0x30] sm:$0xff] %v310
    %319 = vst [vmem:[#allocation2 + $0x38] sm:$0xff] %v311
    // Predicated region
    $region22: #{tpu_custom_call.1} parent=1 // pred_check
      _
    $region23: #{tpu_custom_call.1} parent=1 // pred_check_branch
      %321 = sbr.rel (0) target = $region25
    $region24: #{tpu_custom_call.1} parent=1 // pred_region
      %s323 = ssub.s32 1024, 1024
      %324 = vsyncadd [#allocation3], %s323
      %s325 = sshll.u32 [#allocation2], 4
      %s326 = int_to_ptr.vmem [resolvable:$true] %s325
      %331 = dma.vmem_to_hbm [thread:$0]  %s326, 1024, %s5, [#allocation3], 128, 128, 8
    $region25: #{tpu_custom_call.1} parent=1 // pred_fallthru
      _
    // Predicated region
    $region26: #{tpu_custom_call.1} parent=1 // pred_check
      _
    $region27: #{tpu_custom_call.1} parent=1 // pred_check_branch
      %333 = sbr.rel (0) target = $region29
    $region28: #{tpu_custom_call.1} parent=1 // pred_region
      %334 = dma.done [#allocation3], 1024
    $region29: #{tpu_custom_call.1} parent=1 // pred_fallthru
      _
    %335 = vsyncpa [#allocation3], 1

</llo_original>
